<compile_context>
chip_gen: v6e
topology: v6e:2x2x1
jax: 0.10.0
libtpu: 0.0.40
codegen_flags: <defaults>
</compile_context>

<pallas_src>
import jax
import jax.numpy as jnp
from jax.experimental import pallas as pl
from jax.experimental.pallas import tpu as pltpu


def _attn_energies_kernel(enc_ref, h_ref, we_ref, wa_ref, o_ref):
    """One grid step == TL encoder timesteps (flattened with batch, row = t*B + b).

    enc_ref : (TL*B, E)  bf16  encoder rows for this tile (streamed)
    h_ref   : (TL*B, Hs) f32   hidden @ Wh.T + linear.bias, tiled over TL (resident)
    we_ref  : (E, Hs)    bf16  encoder half of linear.weight, transposed (resident)
    wa_ref  : (1, Hs)    f32   attn.weight row (resident; attn.bias folded away)
    o_ref   : (TL*B, 1)  f32   energies for this tile
    """
    # Main projection on the MXU: M = TL*B, K = E, N = Hs, f32 accumulation.
    pre = jnp.dot(enc_ref[...], we_ref[...], preferred_element_type=jnp.float32)
    # Timestep-invariant hidden contribution + ReLU (VPU, f32).
    act = jnp.maximum(pre + h_ref[...], 0.0)
    # Hs -> 1 projection as VPU multiply + XLU lane reduce (keeps the MXU free).
    o_ref[...] = jnp.sum(act * wa_ref[...], axis=-1, keepdims=True)


def _choose_tl(L, B, E, Hs, target_tl=128, vmem_budget=48 * 1024 * 1024):
    """Pick the timestep tile so TL*B is sublane-aligned and fits VMEM (v7x: 64 MiB)."""
    def bump(t):
        while (t * B) % 8 != 0:      # sublane granule for the (TL*B, ...) blocks
            t += 1
        return t

    def footprint(t):
        tlb = t * B
        return (2 * tlb * E * 2            # double-buffered enc tiles (bf16)
                + 2 * tlb * 4              # double-buffered energy tiles (f32)
                + tlb * Hs * 4             # resident tiled hidden projection (f32)
                + E * Hs * 2 + Hs * 4      # resident weights
                + 2 * tlb * Hs * 4)        # in-flight f32 intermediates (pre / act)

    tl = bump(max(1, min(target_tl, L)))
    while tl > 8 and footprint(tl) > vmem_budget:
        tl = bump(max(8, tl // 2))
    return tl, footprint(tl)


def attn_forward(hidden, encoder_outputs, params, *, target_tl=128):
    """hidden: (B, Hd) f32, encoder_outputs: (L, B, E) f32  ->  (B, 1, L) f32."""
    L, B, E = encoder_outputs.shape
    Hd = hidden.shape[1]
    W1, b1, Wa = params["W1"], params["b1"], params["Wa"]
    Hs = W1.shape[0]
    assert W1.shape[1] == E + Hd, "input_size must equal enc_dim + hidden_state_dim"

    tl, fp = _choose_tl(L, B, E, Hs, target_tl)
    tlb = tl * B
    nsteps = pl.cdiv(L, tl)

    # cat([enc, hidden]) @ W1.T == enc @ We.T + hidden @ Wh.T (concat is on the
    # contracted axis), so only the encoder half We enters the kernel.
    We_t = W1[:, :E].T                                   # (E, Hs)
    Wh_t = W1[:, E:].T                                   # (Hd, Hs)

    # Streamed input: bf16 halves the dominant HBM read and feeds the MXU at its
    # native rate (f32 accumulation in-kernel).  The (L, B, E) -> (L*B, E) reshape
    # is free (contiguous); in production the encoder outputs would ideally already
    # be bf16, making this cast a no-op.
    enc_flat = encoder_outputs.reshape(L * B, E).astype(jnp.bfloat16)
    we_bf = We_t.astype(jnp.bfloat16)

    # Timestep-invariant hidden contribution: computed once (tiny) and tiled so the
    # in-kernel add is a plain elementwise op on matching 2-D tiles (no in-kernel
    # broadcast / relayout needed even when B is not sublane-aligned).
    h_proj = (hidden.astype(jnp.float32) @ Wh_t.astype(jnp.float32)
              + b1.reshape(1, Hs).astype(jnp.float32))   # (B, Hs)
    h_tiled = jnp.tile(h_proj, (tl, 1))                  # (TL*B, Hs)

    # attn.bias folded away (softmax shift-invariance -> exact).
    wa_row = Wa.reshape(1, Hs).astype(jnp.float32)

    vmem_limit = int(min(64 * 1024 * 1024, max(4 * 1024 * 1024, 2 * fp)))

    energies = pl.pallas_call(
        _attn_energies_kernel,
        out_shape=jax.ShapeDtypeStruct((L * B, 1), jnp.float32),
        grid=(nsteps,),
        in_specs=[
            pl.BlockSpec((tlb, E), lambda t: (t, 0)),     # streamed enc tile
            pl.BlockSpec((tlb, Hs), lambda t: (0, 0)),    # resident
            pl.BlockSpec((E, Hs), lambda t: (0, 0)),      # resident
            pl.BlockSpec((1, Hs), lambda t: (0, 0)),      # resident
        ],
        out_specs=pl.BlockSpec((tlb, 1), lambda t: (t, 0)),
        compiler_params=pltpu.CompilerParams(
            dimension_semantics=("parallel",),            # steps independent -> megacore-able
            vmem_limit_bytes=vmem_limit,
        ),
    )(enc_flat, h_tiled, we_bf, wa_row)

    # Tiny epilogue (L*B floats), fused into the output-layout op that was needed
    # anyway: softmax over L per batch row, then (L, B) -> (B, 1, L).
    e = energies.reshape(L, B)
    probs = jax.nn.softmax(e, axis=0)
    return jnp.transpose(probs)[:, None, :]


def attn_reference(hidden, encoder_outputs, params):
    """Pure-JAX f32 reference matching the PyTorch loop exactly (includes attn.bias)."""
    W1, b1, Wa, ba = params["W1"], params["b1"], params["Wa"], params["ba"]
    L = encoder_outputs.shape[0]
    cols = []
    for i in range(L):
        x = jnp.concatenate([encoder_outputs[i], hidden], axis=1)
        o = jax.nn.relu(x @ W1.T + b1)
        o = o @ Wa.T + ba
        cols.append(o)
    energies = jnp.concatenate(cols, axis=1)
    return jax.nn.softmax(energies, axis=1)[:, None, :]


if __name__ == "__main__":
    # Small deterministic shapes consistent with the module:
    #   enc feature dim E=16, decoder hidden-state dim Hd=16 -> input_size = 32
    #   hidden_size Hs = 32, max_len L = 8, batch B = 2
    B, L, E, Hd, Hs = 2, 8, 16, 16, 32
    input_size = E + Hd

    key = jax.random.PRNGKey(0)
    k_enc, k_hid, k_w1, k_b1, k_wa, k_ba = jax.random.split(key, 6)

    encoder_outputs = jax.random.normal(k_enc, (L, B, E), jnp.float32)
    hidden = jax.random.normal(k_hid, (B, Hd), jnp.float32)

    # Deterministic parameter init (uniform +/- 1/sqrt(fan_in), like nn.Linear)
    params = {
        "W1": jax.random.uniform(k_w1, (Hs, input_size), jnp.float32,
                                 -1.0 / input_size ** 0.5, 1.0 / input_size ** 0.5),
        "b1": jax.random.uniform(k_b1, (Hs,), jnp.float32,
                                 -1.0 / input_size ** 0.5, 1.0 / input_size ** 0.5),
        "Wa": jax.random.uniform(k_wa, (1, Hs), jnp.float32,
                                 -1.0 / Hs ** 0.5, 1.0 / Hs ** 0.5),
        "ba": jax.random.uniform(k_ba, (1,), jnp.float32,
                                 -1.0 / Hs ** 0.5, 1.0 / Hs ** 0.5),
    }

    ref = attn_reference(hidden, encoder_outputs, params)

    # Multi-step tiling: 2 grid steps of TL=4 timesteps each.
    out = jax.block_until_ready(
        attn_forward(hidden, encoder_outputs, params, target_tl=4))
    assert out.shape == (B, 1, L), out.shape
    # Tolerance accommodates bf16 MXU inputs (f32 accumulation); the attn.bias fold
    # is mathematically exact under softmax shift-invariance.
    assert jnp.allclose(out, ref, rtol=2e-2, atol=2e-2), (out, ref)
    assert jnp.allclose(jnp.sum(out, axis=-1), 1.0, rtol=1e-5, atol=1e-5)

    # Default tiling (single tile covering all of L).
    out_full = jax.block_until_ready(attn_forward(hidden, encoder_outputs, params))
    assert jnp.allclose(out_full, ref, rtol=2e-2, atol=2e-2)

    # Ragged L (partial last tile handled by Pallas block padding / masked writeback).
    out_ragged = jax.block_until_ready(
        attn_forward(hidden, encoder_outputs[:7], params, target_tl=4))
    ref_ragged = attn_reference(hidden, encoder_outputs[:7], params)
    assert out_ragged.shape == (B, 1, 7), out_ragged.shape
    assert jnp.allclose(out_ragged, ref_ragged, rtol=2e-2, atol=2e-2)

    print("KERNEL_OK")
</pallas_src>

<mosaic_0001>
module attributes {stable_mosaic.version = 11 : i64} {
  func.func @_attn_energies_kernel(%arg0: i32, %arg1: memref<8x16xbf16, #tpu.memory_space<vmem>>, %arg2: memref<8x32xf32, #tpu.memory_space<vmem>>, %arg3: memref<16x32xbf16, #tpu.memory_space<vmem>>, %arg4: memref<1x32xf32, #tpu.memory_space<vmem>>, %arg5: memref<8x1xf32, #tpu.memory_space<vmem>>) attributes {dimension_semantics = [#tpu.dimension_semantics<parallel>], iteration_bounds = array<i64: 2>, scalar_prefetch = 0 : i64, scratch_operands = 0 : i64, tpu.core_type = #tpu.core_type<tc>, window_params = [{transform_indices = @transform_0, window_bounds = array<i64: 8, 16>}, {pipeline_mode = #tpu.pipeline_mode<synchronous>, transform_indices = @transform_1, window_bounds = array<i64: 8, 32>}, {pipeline_mode = #tpu.pipeline_mode<synchronous>, transform_indices = @transform_2, window_bounds = array<i64: 16, 32>}, {pipeline_mode = #tpu.pipeline_mode<synchronous>, transform_indices = @transform_3, window_bounds = array<i64: 1, 32>}, {transform_indices = @transform_4, window_bounds = array<i64: 8, 1>}]} {
    %c0 = arith.constant 0 : index
    %c0_0 = arith.constant 0 : index
    %0 = vector.load %arg1[%c0, %c0_0] : memref<8x16xbf16, #tpu.memory_space<vmem>>, vector<8x16xbf16>
    %c0_1 = arith.constant 0 : index
    %c0_2 = arith.constant 0 : index
    %1 = vector.load %arg3[%c0_1, %c0_2] : memref<16x32xbf16, #tpu.memory_space<vmem>>, vector<16x32xbf16>
    %cst = arith.constant dense<0.000000e+00> : vector<8x32xf32>
    %2 = tpu.matmul %0, %1, %cst {dimension_numbers = #tpu.dot_dimension_numbers<[1], [0], [0], [1], [0, 0, 1, 1], [], []>} : vector<8x16xbf16>, vector<16x32xbf16>, vector<8x32xf32> -> vector<8x32xf32>
    %c0_3 = arith.constant 0 : index
    %c0_4 = arith.constant 0 : index
    %3 = vector.load %arg2[%c0_3, %c0_4] : memref<8x32xf32, #tpu.memory_space<vmem>>, vector<8x32xf32>
    %4 = arith.addf %2, %3 : vector<8x32xf32>
    %cst_5 = arith.constant 0.000000e+00 : f32
    %5 = vector.broadcast %cst_5 : f32 to vector<8x32xf32>
    %6 = arith.maximumf %4, %5 : vector<8x32xf32>
    %c0_6 = arith.constant 0 : index
    %c0_7 = arith.constant 0 : index
    %7 = vector.load %arg4[%c0_6, %c0_7] : memref<1x32xf32, #tpu.memory_space<vmem>>, vector<1x32xf32>
    %8 = vector.broadcast %7 : vector<1x32xf32> to vector<8x32xf32>
    %9 = arith.mulf %6, %8 : vector<8x32xf32>
    %cst_8 = arith.constant dense<0.000000e+00> : vector<8xf32>
    %10 = vector.multi_reduction <add>, %9, %cst_8 [1] : vector<8x32xf32> to vector<8xf32>
    %11 = vector.shape_cast %10 : vector<8xf32> to vector<8x1xf32>
    %c0_9 = arith.constant 0 : index
    %c0_10 = arith.constant 0 : index
    %12 = vector.load %arg5[%c0_9, %c0_10] : memref<8x1xf32, #tpu.memory_space<vmem>>, vector<8x1xf32>
    tpu.vector_store %arg5[%c0_9, %c0_10], %11 {strides = array<i32>} : memref<8x1xf32, #tpu.memory_space<vmem>>, vector<8x1xf32>,
    return
  }
  func.func @transform_0(%arg0: i32) -> (i32, i32) {
    %c0_i32 = arith.constant 0 : i32
    %c0_i32_0 = arith.constant 0 : i32
    return %arg0, %c0_i32 : i32, i32
  }
  func.func @transform_1(%arg0: i32) -> (i32, i32) {
    %c0_i32 = arith.constant 0 : i32
    %c0_i32_0 = arith.constant 0 : i32
    %c0_i32_1 = arith.constant 0 : i32
    return %c0_i32, %c0_i32_0 : i32, i32
  }
  func.func @transform_2(%arg0: i32) -> (i32, i32) {
    %c0_i32 = arith.constant 0 : i32
    %c0_i32_0 = arith.constant 0 : i32
    %c0_i32_1 = arith.constant 0 : i32
    return %c0_i32, %c0_i32_0 : i32, i32
  }
  func.func @transform_3(%arg0: i32) -> (i32, i32) {
    %c0_i32 = arith.constant 0 : i32
    %c0_i32_0 = arith.constant 0 : i32
    %c0_i32_1 = arith.constant 0 : i32
    return %c0_i32, %c0_i32_0 : i32, i32
  }
  func.func @transform_4(%arg0: i32) -> (i32, i32) {
    %c0_i32 = arith.constant 0 : i32
    %c0_i32_0 = arith.constant 0 : i32
    return %arg0, %c0_i32 : i32, i32
  }
}

</mosaic_0001>

<llo_original>
// kernel: tpu_custom_call.1
$region0: #{tpu_custom_call.1}
  #allocation0 [shape = 'u32[]', space=smem, size = 0x4, offset = 0x4, fixed_abs, tag = 'smem constant byte address 0x4 - core index']
  #allocation1 [shape = 'u32[144,128]{1,0:T(1,128)}', space=vmem, size = 0x12000, scoped, tag = 'internal scratch']
  %s0 = inlined_call_operand.hbm [shape: bf16[16,16], index: 0, kind: input, shape index: {}]
  %s1 = inlined_call_operand.hbm [shape: f32[8,32], index: 1, kind: input, shape index: {}]
  %s2 = inlined_call_operand.hbm [shape: bf16[16,32], index: 2, kind: input, shape index: {}]
  %s3 = inlined_call_operand.vmem [shape: f32[1,32], index: 3, kind: input, shape index: {}]
  %s4 = inlined_call_operand.vmem [shape: f32[16,1], index: 4, kind: output, shape index: {}]
  %s5 = sld [smem:[#allocation0]]
  $region61: #{tpu_custom_call.1} parent=0
    _
  %s7 = ssub.s32 1, %s5
  %s8 = scalar_select 0, %s7, %s5
  $region1: #{tpu_custom_call.1} parent=0
    #allocation2 [shape = 'u8[4096]{0}', space=vmem, size = 0x1000, scoped, tag = 'input window, operand 0']
    #allocation3 [shape = 's32[2]{0}', space=sflag, size = 0x8, scoped, tag = 'scoped memory for tpu_custom_call.1']
    #allocation4 [shape = 'u8[4096]{0}', space=vmem, size = 0x1000, scoped, tag = 'input window, operand 1, single buffered']
    #allocation5 [shape = 's32[1]{0}', space=sflag, size = 0x4, scoped, tag = 'scoped memory for tpu_custom_call.1']
    #allocation6 [shape = 'u8[4096]{0}', space=vmem, size = 0x1000, scoped, tag = 'input window, operand 2, single buffered']
    %9 = vsyncpa [#allocation3], 0
    %s10 = scalar_lea.sflag [#allocation3], 1
    %11 = vsyncpa %s10, 0
    %12 = vsyncpa [#allocation5], 0
    loop: start=0, step=1, limit=4
    $region2: #{tpu_custom_call.1} parent=1 // loop_pre_header
      _
    $region3: #{tpu_custom_call.1} parent=1 // loop_header
      %s14 = sphi 0, %s18
      %p15 = scmp.ge.s32.totalorder %s14, 4
      %s24 = sphi 0, %s26
      %s27 = sphi 0, %s24
      %s28 = sphi 0, %s27
      %s44 = sphi 0, %s28
      %s48 = sphi 0, %s48
      %s50 = sphi 0, %s48
      %s51 = sphi 0, %s50
      %s65 = sphi 0, %s51
      %s69 = sphi 0, %s69
      %s71 = sphi 0, %s69
      %s72 = sphi 0, %s71
      %s86 = sphi 0, %s72
      %s90 = sphi 0, %s90
      %s92 = sphi 0, %s90
      %s93 = sphi 0, %s92
      %s107 = sphi 0, %s93
      %s113 = sphi 0, %s115
      %s116 = sphi 0, %s113
      %s117 = sphi 0, %s116
      %s133 = sphi 0, %s117
    $region4: #{tpu_custom_call.1} parent=1 // loop_header_branch
      %17 = sbr.rel (%p15) target = $region8
    $region5: #{tpu_custom_call.1} parent=1 // loop_body
      %s19 = ssub.s32 %s14, 1
      %s20 = ssub.s32 %s14, 2
      %s21 = sadd.s32 %s14, 1
      %s22 = ssub.s32 %s14, %s21
      %p23 = scmp.eq.s32.totalorder %s22, 0
      %s25 = sadd.s32 %s24, 1
      %s26 = scalar_select %p23, %s24, %s25
      %p29 = pneg %p23
      %p30 = scmp.eq.s32.totalorder %s14, 1
      %p31 = por %p29, %p30
      %p32 = scmp.ne.s32.totalorder %s24, %s27
      %p33 = scmp.eq.s32.totalorder %s14, 0
      %p34 = por %p32, %p33
      %p35 = scmp.ne.s32.totalorder %s24, %s27
      %p36 = scmp.eq.s32.totalorder %s19, 1
      %p37 = por %p35, %p36
      %p38 = scmp.ne.s32.totalorder %s27, %s28
      %p39 = scmp.eq.s32.totalorder %s19, 0
      %p40 = por %p38, %p39
      %p41 = scmp.ne.s32.totalorder %s27, %s28
      %p42 = scmp.eq.s32.totalorder %s20, 1
      %p43 = por %p41, %p42
      %p45 = scmp.ne.s32.totalorder %s28, %s44
      %p46 = scmp.eq.s32.totalorder %s20, 0
      %p47 = por %p45, %p46
      %s49 = sadd.s32 %s48, 1
      %p52 = scmp.eq.s32.totalorder %s14, 1
      %p53 = scmp.ne.s32.totalorder %s48, %s50
      %p54 = scmp.eq.s32.totalorder %s14, 0
      %p55 = por %p53, %p54
      %p56 = scmp.ne.s32.totalorder %s48, %s50
      %p57 = scmp.eq.s32.totalorder %s19, 1
      %p58 = por %p56, %p57
      %p59 = scmp.ne.s32.totalorder %s50, %s51
      %p60 = scmp.eq.s32.totalorder %s19, 0
      %p61 = por %p59, %p60
      %p62 = scmp.ne.s32.totalorder %s50, %s51
      %p63 = scmp.eq.s32.totalorder %s20, 1
      %p64 = por %p62, %p63
      %p66 = scmp.ne.s32.totalorder %s51, %s65
      %p67 = scmp.eq.s32.totalorder %s20, 0
      %p68 = por %p66, %p67
      %s70 = sadd.s32 %s69, 1
      %p73 = scmp.eq.s32.totalorder %s14, 1
      %p74 = scmp.ne.s32.totalorder %s69, %s71
      %p75 = scmp.eq.s32.totalorder %s14, 0
      %p76 = por %p74, %p75
      %p77 = scmp.ne.s32.totalorder %s69, %s71
      %p78 = scmp.eq.s32.totalorder %s19, 1
      %p79 = por %p77, %p78
      %p80 = scmp.ne.s32.totalorder %s71, %s72
      %p81 = scmp.eq.s32.totalorder %s19, 0
      %p82 = por %p80, %p81
      %p83 = scmp.ne.s32.totalorder %s71, %s72
      %p84 = scmp.eq.s32.totalorder %s20, 1
      %p85 = por %p83, %p84
      %p87 = scmp.ne.s32.totalorder %s72, %s86
      %p88 = scmp.eq.s32.totalorder %s20, 0
      %p89 = por %p87, %p88
      %s91 = sadd.s32 %s90, 1
      %p94 = scmp.eq.s32.totalorder %s14, 1
      %p95 = scmp.ne.s32.totalorder %s90, %s92
      %p96 = scmp.eq.s32.totalorder %s14, 0
      %p97 = por %p95, %p96
      %p98 = scmp.ne.s32.totalorder %s90, %s92
      %p99 = scmp.eq.s32.totalorder %s19, 1
      %p100 = por %p98, %p99
      %p101 = scmp.ne.s32.totalorder %s92, %s93
      %p102 = scmp.eq.s32.totalorder %s19, 0
      %p103 = por %p101, %p102
      %p104 = scmp.ne.s32.totalorder %s92, %s93
      %p105 = scmp.eq.s32.totalorder %s20, 1
      %p106 = por %p104, %p105
      %p108 = scmp.ne.s32.totalorder %s93, %s107
      %p109 = scmp.eq.s32.totalorder %s20, 0
      %p110 = por %p108, %p109
      %s111 = ssub.s32 %s14, %s21
      %p112 = scmp.eq.s32.totalorder %s111, 0
      %s114 = sadd.s32 %s113, 1
      %s115 = scalar_select %p112, %s113, %s114
      %p118 = pneg %p112
      %p119 = scmp.eq.s32.totalorder %s14, 1
      %p120 = por %p118, %p119
      %p121 = scmp.ne.s32.totalorder %s113, %s116
      %p122 = scmp.eq.s32.totalorder %s14, 0
      %p123 = por %p121, %p122
      %p124 = scmp.ne.s32.totalorder %s113, %s116
      %p125 = scmp.eq.s32.totalorder %s19, 1
      %p126 = por %p124, %p125
      %p127 = scmp.ne.s32.totalorder %s116, %s117
      %p128 = scmp.eq.s32.totalorder %s19, 0
      %p129 = por %p127, %p128
      %p130 = scmp.ne.s32.totalorder %s116, %s117
      %p131 = scmp.eq.s32.totalorder %s20, 1
      %p132 = por %p130, %p131
      %p134 = scmp.ne.s32.totalorder %s117, %s133
      %p135 = scmp.eq.s32.totalorder %s20, 0
      %p136 = por %p134, %p135
      %p137 = scmp.le.s32.totalorder 1, %s14
      %p138 = scmp.lt.s32.totalorder %s14, 3
      %p139 = pnand %p137, %p138
      %p140 = pneg %p139
      // Predicated region
      $region9: #{tpu_custom_call.1} parent=5 // pred_check
        _
      $region10: #{tpu_custom_call.1} parent=5 // pred_check_branch
        %142 = sbr.rel (%p139) target = $region12
      $region11: #{tpu_custom_call.1} parent=5 // pred_region
        %s143 = ssub.s32 %s14, 1
        // Predicated region
        $region13: #{tpu_custom_call.1} parent=11 // pred_check
          %p144 = pneg %p61
        $region14: #{tpu_custom_call.1} parent=11 // pred_check_branch
          %146 = sbr.rel (%p144) target = $region16
        $region15: #{tpu_custom_call.1} parent=11 // pred_region
          %s148 = ssub.s32 128, 128
          %149 = vsyncadd [#allocation5], %s148
          %s151 = sshll.u32 [#allocation4], 4
          %s152 = int_to_ptr.vmem [resolvable:$true] %s151
          %154 = dma.hbm_to_vmem [thread:$0]  %s1, 128, %s152, [#allocation5]
        $region16: #{tpu_custom_call.1} parent=11 // pred_fallthru
          _
        // Predicated region
        $region17: #{tpu_custom_call.1} parent=11 // pred_check
          %p155 = pneg %p82
        $region18: #{tpu_custom_call.1} parent=11 // pred_check_branch
          %157 = sbr.rel (%p155) target = $region20
        $region19: #{tpu_custom_call.1} parent=11 // pred_region
          %s159 = ssub.s32 128, 128
          %160 = vsyncadd [#allocation5], %s159
          %s161 = sshll.u32 [#allocation6], 4
          %s162 = int_to_ptr.vmem [resolvable:$true] %s161
          %167 = dma.hbm_to_vmem [thread:$0]  %s2, 128, %s162, [#allocation5], 64, 64, 4
        $region20: #{tpu_custom_call.1} parent=11 // pred_fallthru
          _
        // Predicated region
        $region21: #{tpu_custom_call.1} parent=11 // pred_check
          %p168 = pneg %p103
        $region22: #{tpu_custom_call.1} parent=11 // pred_check_branch
          %170 = sbr.rel (%p168) target = $region24
        $region23: #{tpu_custom_call.1} parent=11 // pred_region
          _
        $region24: #{tpu_custom_call.1} parent=11 // pred_fallthru
          _
      $region12: #{tpu_custom_call.1} parent=5 // pred_fallthru
        _
      %p171 = scmp.lt.s32.totalorder %s14, 2
      // Predicated region
      $region25: #{tpu_custom_call.1} parent=5 // pred_check
        %p172 = pneg %p171
      $region26: #{tpu_custom_call.1} parent=5 // pred_check_branch
        %174 = sbr.rel (%p172) target = $region28
      $region27: #{tpu_custom_call.1} parent=5 // pred_region
        // Predicated region
        $region29: #{tpu_custom_call.1} parent=27 // pred_check
          %p175 = pneg %p34
        $region30: #{tpu_custom_call.1} parent=27 // pred_check_branch
          %177 = sbr.rel (%p175) target = $region32
        $region31: #{tpu_custom_call.1} parent=27 // pred_region
          %s178 = sand.u32 %s24, 1
          %s179 = scalar_lea.sflag [#allocation3], %s178
          %s180 = sand.u32 %s24, 1
          %s181 = smul.addr %s180, 4
          %s182 = scalar_lea.vmem [#allocation2], %s181
          %s184 = ssub.s32 64, 64
          %185 = vsyncadd %s179, %s184
          %s186 = smul.addr %s14, 64
          %s187 = scalar_lea.hbm %s0, %s186
          %s189 = sshll.u32 %s182, 4
          %s190 = int_to_ptr.vmem [resolvable:$true] %s189
          %192 = dma.hbm_to_vmem [thread:$0]  %s187, 64, %s190, %s179
        $region32: #{tpu_custom_call.1} parent=27 // pred_fallthru
          _
      $region28: #{tpu_custom_call.1} parent=5 // pred_fallthru
        _
      %p193 = scmp.le.s32.totalorder 1, %s14
      %p194 = scmp.lt.s32.totalorder %s14, 3
      %p195 = pnand %p193, %p194
      %p196 = pneg %p195
      // Predicated region
      $region33: #{tpu_custom_call.1} parent=5 // pred_check
        _
      $region34: #{tpu_custom_call.1} parent=5 // pred_check_branch
        %198 = sbr.rel (%p195) target = $region36
      $region35: #{tpu_custom_call.1} parent=5 // pred_region
        %s199 = ssub.s32 %s14, 1
        %s200 = sand.u32 %s27, 1
        %s201 = scalar_lea.sflag [#allocation3], %s200
        %s202 = sand.u32 %s27, 1
        %s203 = smul.addr %s202, 4
        %s204 = scalar_lea.vmem [#allocation2], %s203
        // Predicated region
        $region37: #{tpu_custom_call.1} parent=35 // pred_check
          %p205 = pneg %p40
        $region38: #{tpu_custom_call.1} parent=35 // pred_check_branch
          %207 = sbr.rel (%p205) target = $region40
        $region39: #{tpu_custom_call.1} parent=35 // pred_region
          %208 = dma.done %s201, 64
        $region40: #{tpu_custom_call.1} parent=35 // pred_fallthru
          _
        // Predicated region
        $region41: #{tpu_custom_call.1} parent=35 // pred_check
          %p209 = pneg %p61
        $region42: #{tpu_custom_call.1} parent=35 // pred_check_branch
          %211 = sbr.rel (%p209) target = $region44
        $region43: #{tpu_custom_call.1} parent=35 // pred_region
          %212 = dma.done [#allocation5], 128
        $region44: #{tpu_custom_call.1} parent=35 // pred_fallthru
          _
        // Predicated region
        $region45: #{tpu_custom_call.1} parent=35 // pred_check
          %p213 = pneg %p82
        $region46: #{tpu_custom_call.1} parent=35 // pred_check_branch
          %215 = sbr.rel (%p213) target = $region48
        $region47: #{tpu_custom_call.1} parent=35 // pred_region
          %216 = dma.done [#allocation5], 128
        $region48: #{tpu_custom_call.1} parent=35 // pred_fallthru
          _
        %s217 = sand.u32 %s27, 1
        %s218 = scalar_lea.sflag [#allocation3], %s217
        %s219 = sand.u32 %s27, 1
        %s220 = smul.addr %s219, 4
        %s221 = scalar_lea.vmem [#allocation2], %s220
        %p222 = pneg %p40
        %p223 = pneg %p37
        %p224 = pneg %p61
        %p225 = pneg %p58
        %p226 = pneg %p82
        %p227 = pneg %p79
        %p228 = pneg %p103
        %p229 = pneg %p100
        %p230 = pneg %p129
        %p231 = pneg %p126
        %p232 = scmp.lt.s32.totalorder %s19, 1
        %s233 = scalar_select %p232, %s19, 1
        %s234 = smul.addr %s233, 8
        %s235 = scalar_lea.vmem %s4, %s234
        %p236 = scmp.lt.s32.totalorder %s19, 1
        %s237 = scalar_select %p236, %s19, 1
        %s238 = smul.addr %s237, 8
        %s239 = scalar_lea.vmem %s4, %s238
        %v241 = vld [vmem:[%s204] sm:$0xf]
        %v242 = vld [vmem:[#allocation6] sm:$0xf]
        %v243 = vld [vmem:[#allocation6 + $0x4] sm:$0xf]
        %v244 = vld [vmem:[#allocation4] sm:$0xff]
        %v247 = vunpack.c.l.b16 %v242
        %v248 = vunpack.c.l.b16 %v243
        %v249 = vpack.c.b16 %v248, %v247
        %vm251 = vcmask 130048
        %v253 = vsel %vm251, %v241, 0
        %255 = vmatprep.subr.bf16.mxu0 0
        %256 = vmatpush1.bf16.msra.mxu0 0
        %257 = vmatprep.subr.bf16.mxu0 0
        %258 = vmatpush1.bf16.msra.mxu0 0
        %259 = vmatprep.subr.bf16.mxu0 0
        %260 = vmatpush1.bf16.msra.mxu0 0
        %261 = vmatprep.subr.bf16.mxu0 0
        %262 = vmatpush1.bf16.msra.mxu0 0
        %263 = vmatprep.subr.bf16.mxu0 0
        %264 = vmatpush1.bf16.msra.mxu0 0
        %265 = vmatprep.subr.bf16.mxu0 0
        %266 = vmatpush1.bf16.msra.mxu0 0
        %267 = vmatprep.subr.bf16.mxu0 0
        %268 = vmatpush1.bf16.msra.mxu0 0
        %269 = vmatprep.subr.bf16.mxu0 0
        %270 = vmatpush1.bf16.msra.mxu0 %v249
        %271 = vmatprep.subr.bf16.mxu0 0
        %272 = vmatpush2.bf16.msra.mxu0 0
        %273 = vmatprep.subr.bf16.mxu0 0
        %274 = vmatpush2.bf16.msra.mxu0 0
        %275 = vmatprep.subr.bf16.mxu0 0
        %276 = vmatpush2.bf16.msra.mxu0 0
        %277 = vmatprep.subr.bf16.mxu0 0
        %278 = vmatpush2.bf16.msra.mxu0 0
        %279 = vmatprep.subr.bf16.mxu0 0
        %280 = vmatpush2.bf16.msra.mxu0 0
        %281 = vmatprep.subr.bf16.mxu0 0
        %282 = vmatpush2.bf16.msra.mxu0 0
        %283 = vmatprep.subr.bf16.mxu0 0
        %284 = vmatpush2.bf16.msra.mxu0 0
        %285 = vmatprep.subr.bf16.mxu0 0
        %286 = vmatpush2.bf16.msra.mxu0 0
        %287 = vmatprep.mubr.bf16.mxu0 0
        %288 = vmatmul.mubr.bf16.gmra.mxu0 %v253
        %v289 = vpop.f32.mrf.mxu0
        %v290 = vadd.f32 %v244, %v289
        %v291 = vpop.f32.mrf.mxu0
        %v292 = vpop.f32.mrf.mxu0
        %v293 = vpop.f32.mrf.mxu0
        %294 = vdwg.mxu0
        %v295 = vmax.f32 %v290, 0.0
        %v296 = vld [vmem:[%s3] sm:$0x1]
        %v298 = vlaneseq
        %v299 = vshrl.u32 %v298, 7
        %v300 = vsub.s32 0, %v299
        %v301 = vrot.slane %v296, %v300
        %v303 = vmul.f32 %v295, %v301
        %vm304 = vcmask 261120
        %v305 = vsel %vm304, %v303, 0.0
        %306 = vadd.xlane.f32.xlu0 %v305
        %v307 = vpop.xlane.xlu0 %306
        %vm308 = vcmask 7168
        %309 = vst.msk [vmem:[%s239] sm:$0xff] %vm308, %v307
        %p310 = scmp.lt.s32.totalorder %s19, 1
        %s311 = scalar_select %p310, %s19, 1
        %s312 = smul.addr %s311, 8
        %s313 = scalar_lea.vmem %s4, %s312
        // Predicated region
        $region49: #{tpu_custom_call.1} parent=35 // pred_check
          %p314 = pneg %p126
        $region50: #{tpu_custom_call.1} parent=35 // pred_check_branch
          %316 = sbr.rel (%p314) target = $region52
        $region51: #{tpu_custom_call.1} parent=35 // pred_region
          _
        $region52: #{tpu_custom_call.1} parent=35 // pred_fallthru
          _
      $region36: #{tpu_custom_call.1} parent=5 // pred_fallthru
        _
      %p317 = scmp.le.s32.totalorder 2, %s14
      // Predicated region
      $region53: #{tpu_custom_call.1} parent=5 // pred_check
        %p318 = pneg %p317
      $region54: #{tpu_custom_call.1} parent=5 // pred_check_branch
        %320 = sbr.rel (%p318) target = $region56
      $region55: #{tpu_custom_call.1} parent=5 // pred_region
        %s321 = ssub.s32 %s14, 2
        // Predicated region
        $region57: #{tpu_custom_call.1} parent=55 // pred_check
          %p322 = pneg %p132
        $region58: #{tpu_custom_call.1} parent=55 // pred_check_branch
          %324 = sbr.rel (%p322) target = $region60
        $region59: #{tpu_custom_call.1} parent=55 // pred_region
          %p325 = scmp.lt.s32.totalorder %s20, 1
          %s326 = scalar_select %p325, %s20, 1
          %s327 = smul.addr %s326, 8
          %s328 = scalar_lea.vmem %s4, %s327
        $region60: #{tpu_custom_call.1} parent=55 // pred_fallthru
          _
      $region56: #{tpu_custom_call.1} parent=5 // pred_fallthru
        _
    $region6: #{tpu_custom_call.1} parent=1 // loop_footer
      %s18 = sadd.s32 1, %s14
    $region7: #{tpu_custom_call.1} parent=1 // loop_footer_branch
      %13 = sbr.rel target = $region3
    $region8: #{tpu_custom_call.1} parent=1 // loop_exit
      _
    %329 = vsyncpa [#allocation3], 1
    %s330 = scalar_lea.sflag [#allocation3], 1
    %331 = vsyncpa %s330, 1
    %332 = vsyncpa [#allocation5], 1

</llo_original>
